<compile_context>
chip_gen: v5e
topology: v5e:2x2
jax: 0.10.0
libtpu: 0.0.40
codegen_flags: <defaults>
</compile_context>

<pallas_src>
import jax
import jax.numpy as jnp
import numpy as np
from jax import lax
from jax.experimental import pallas as pl
from jax.experimental.pallas import tpu as pltpu

LANE_W = 1024              # lane width of the 2-D slab (multiple of 128 -> lane-dense stores)
MAX_ROW_BLOCK = 1024       # 1024 x 1024 f32 = 4 MiB per block
VMEM_LIMIT_BYTES = 32 * 1024 * 1024  # covers 2x double-buffered 4 MiB blocks on all gens


# ---------------------------------------------------------------------------
# Fused kernel, grid = (2, NB):
#   phase 0 (p == 0): elementwise (VPU) min/max accumulation into (8, W) scratch;
#                     last block: single cross-lane reduce + EMA/scale scalar math
#                     into SMEM scratch; emit current_min/max.
#   phase 1 (p == 1): clamp + linear quantize + dequantize using SMEM params.
# ema_ref (SMEM f32[6]) = [tracked_min_biased, tracked_max_biased, decay,
#                          inv_bias_correction, tail_min, tail_max]
# qp_sc   (SMEM f32[4]) = [clamp_min, clamp_max, scale, inv_scale]
# ---------------------------------------------------------------------------
def _make_fused_kernel(R, RB, W, NB, num_bits):
    rows_partial = (R % RB) != 0          # static: last row-block has invalid rows
    n_levels = float(2 ** (num_bits - 1) - 1)

    def kernel(ema_ref, x_ref, o_ref, cmin_ref, cmax_ref, vmin_sc, vmax_sc, qp_sc):
        p = pl.program_id(0)
        i = pl.program_id(1)

        # ------------------------- phase 0: reduction -------------------------
        @pl.when(p == 0)
        def _phase0():
            @pl.when(i == 0)
            def _():
                vmin_sc[...] = jnp.full_like(vmin_sc, jnp.inf)
                vmax_sc[...] = jnp.full_like(vmax_sc, -jnp.inf)

            def accumulate(x_min, x_max):
                if RB % 8 == 0:
                    # Fold vreg-aligned groups of 8 rows: pure VALU, no XLU.
                    x_min = x_min.reshape(RB // 8, 8, W).min(axis=0)
                    x_max = x_max.reshape(RB // 8, 8, W).max(axis=0)
                else:
                    # Only hit when the whole slab is a single small block.
                    x_min = x_min.min(axis=0, keepdims=True)
                    x_max = x_max.max(axis=0, keepdims=True)
                vmin_sc[...] = jnp.minimum(vmin_sc[...], x_min)
                vmax_sc[...] = jnp.maximum(vmax_sc[...], x_max)

            x = x_ref[...].astype(jnp.float32)

            if rows_partial:
                # Pay the masking VALU cost only on the one partial block.
                @pl.when(i < NB - 1)
                def _():
                    accumulate(x, x)

                @pl.when(i == NB - 1)
                def _():
                    rid = i * RB + lax.broadcasted_iota(jnp.int32, (RB, W), 0)
                    valid = rid < R
                    accumulate(jnp.where(valid, x, jnp.inf),
                               jnp.where(valid, x, -jnp.inf))
            else:
                accumulate(x, x)

            # Finalize once: cross-lane (XLU) reduce + scalar EMA + quant params.
            @pl.when(i == NB - 1)
            def _():
                cmin = jnp.minimum(jnp.min(vmin_sc[...]), ema_ref[4])  # fold tail min
                cmax = jnp.maximum(jnp.max(vmax_sc[...]), ema_ref[5])  # fold tail max
                cmin_ref[...] = jnp.full_like(cmin_ref, cmin)
                cmax_ref[...] = jnp.full_like(cmax_ref, cmax)

                decay = ema_ref[2]
                inv_corr = ema_ref[3]                      # 1/(1 - decay**step), hoisted
                tmin = (ema_ref[0] * decay + (1.0 - decay) * cmin) * inv_corr
                tmax = (ema_ref[1] * decay + (1.0 - decay) * cmax) * inv_corr
                max_abs = jnp.maximum(jnp.abs(tmin), jnp.abs(tmax))
                sat = jnp.where(max_abs == 0.0, n_levels, max_abs)  # all-zero -> scale 1
                # scale / inv_scale via a tiny vector divide + reduce (avoids relying
                # on scalar f32 division lowering); runs once per call, cost ~0.
                sat_vec = jnp.full((8, 128), sat, dtype=jnp.float32)
                scale_vec = n_levels / sat_vec
                qp_sc[0] = -max_abs
                qp_sc[1] = max_abs
                qp_sc[2] = jnp.max(scale_vec)
                qp_sc[3] = jnp.max(1.0 / scale_vec)

        # ----------------------- phase 1: fake quantize -----------------------
        @pl.when(p == 1)
        def _phase1():
            x = x_ref[...].astype(jnp.float32)
            xc = jnp.clip(x, qp_sc[0], qp_sc[1])
            q = jnp.round(qp_sc[2] * xc)                       # linear_quantize (zp = 0)
            o_ref[...] = (q * qp_sc[3]).astype(o_ref.dtype)    # linear_dequantize

    return kernel


def _fused_fake_quant(x2d, params, R, RB, W, out_dtype, num_bits):
    NB = (R + RB - 1) // RB
    kernel = _make_fused_kernel(R, RB, W, NB, num_bits)
    out2d, cmin_b, cmax_b = pl.pallas_call(
        kernel,
        out_shape=(jax.ShapeDtypeStruct((R, W), out_dtype),
                   jax.ShapeDtypeStruct((8, 128), jnp.float32),
                   jax.ShapeDtypeStruct((8, 128), jnp.float32)),
        grid_spec=pltpu.PrefetchScalarGridSpec(
            num_scalar_prefetch=0,
            grid=(2, NB),
            in_specs=[pl.BlockSpec(memory_space=pltpu.MemorySpace.SMEM),
                      pl.BlockSpec((RB, W), lambda p, i: (i, 0))],
            # Output block index is pinned to 0 during phase 0 (never written there),
            # so each output block is flushed to HBM exactly once, with phase-1 data.
            out_specs=(pl.BlockSpec((RB, W), lambda p, i: (i * p, 0)),
                       pl.BlockSpec((8, 128), lambda p, i: (0, 0)),
                       pl.BlockSpec((8, 128), lambda p, i: (0, 0))),
            scratch_shapes=[pltpu.VMEM((8, W), jnp.float32),
                            pltpu.VMEM((8, W), jnp.float32),
                            pltpu.SMEM((4,), jnp.float32)]),
        compiler_params=pltpu.CompilerParams(
            dimension_semantics=("arbitrary", "arbitrary"),
            vmem_limit_bytes=VMEM_LIMIT_BYTES),
    )(params, x2d)
    return out2d, cmin_b, cmax_b


# ---------------------------------------------------------------------------
# Module state / glue (plain JAX scalars).
# ---------------------------------------------------------------------------
def update_ema(biased_ema, value, decay, step):
    biased_ema = biased_ema * decay + (1.0 - decay) * value
    unbiased_ema = biased_ema / (1.0 - decay ** step)
    return biased_ema, unbiased_ema


def init_state(ema_decay=0.999):
    return {
        "ema_decay": jnp.float32(ema_decay),
        "tracked_min_biased": jnp.float32(0.0),
        "tracked_min": jnp.float32(0.0),
        "tracked_max_biased": jnp.float32(0.0),
        "tracked_max": jnp.float32(0.0),
        "iter_count": jnp.float32(0.0),
        "scale": jnp.float32(1.0),
        "zero_point": jnp.float32(0.0),
    }


def fake_linear_quantization_forward(x, state, num_bits=8):
    """Forward pass of FakeLinearQuantization (SYMMETRIC mode, dequantize=True)."""
    orig_shape = x.shape
    orig_dtype = x.dtype

    n = x.size
    flat = x.reshape(-1)
    W = LANE_W
    R = n // W
    tail_n = n - R * W

    iter_count = state["iter_count"] + 1.0
    decay = state["ema_decay"]
    inv_bias_corr = 1.0 / (1.0 - decay ** iter_count)
    n_levels = float(2 ** (num_bits - 1) - 1)

    # ---- lane tail (< 1024 elements): min/max in plain JAX ----
    if tail_n > 0:
        tail = flat[R * W:].astype(jnp.float32)
        tail_min, tail_max = jnp.min(tail), jnp.max(tail)
    else:
        tail_min = jnp.float32(jnp.inf)
        tail_max = jnp.float32(-jnp.inf)

    # ---- fused Pallas kernel on the (R, W) bulk ----
    if R > 0:
        bulk = flat if tail_n == 0 else flat[: R * W]
        x2d = bulk.reshape(R, W)                        # free reshape (contiguous)
        RB = R if R < MAX_ROW_BLOCK else MAX_ROW_BLOCK  # full-dim block or 4 MiB block
        params = jnp.stack([state["tracked_min_biased"], state["tracked_max_biased"],
                            decay, inv_bias_corr, tail_min, tail_max]).astype(jnp.float32)
        out2d, cmin_b, cmax_b = _fused_fake_quant(x2d, params, R, RB, W,
                                                  orig_dtype, num_bits)
        current_min = cmin_b[0, 0]      # kernel already folded the tail min/max in
        current_max = cmax_b[0, 0]
    else:
        current_min, current_max = tail_min, tail_max

    # ---- EMA tracking + quantization params for the returned state ----
    tmin_b, tmin = update_ema(state["tracked_min_biased"], current_min, decay, iter_count)
    tmax_b, tmax = update_ema(state["tracked_max_biased"], current_max, decay, iter_count)

    max_abs = jnp.maximum(jnp.abs(tmin), jnp.abs(tmax))
    sat_val = jnp.where(max_abs == 0.0, n_levels, max_abs)
    scale = n_levels / sat_val
    inv_scale = 1.0 / scale
    zero_point = jnp.float32(0.0)
    actual_min, actual_max = -max_abs, max_abs
    # TODO(synk): ASYMMETRIC_{UNSIGNED,SIGNED} modes not wired (module default is SYMMETRIC).

    # ---- tail fake-quant in plain JAX ----
    if tail_n > 0:
        tq = jnp.round(scale * jnp.clip(tail, actual_min, actual_max))
        tail_out = (tq * inv_scale).astype(orig_dtype)

    if R > 0 and tail_n > 0:
        # TODO(synk): concatenate rewrites the whole output; fold the tail into a
        #             lane-masked last block if non-multiple-of-1024 sizes matter.
        out = jnp.concatenate([out2d.reshape(-1), tail_out]).reshape(orig_shape)
    elif R > 0:
        out = out2d.reshape(orig_shape)                 # free reshape, already orig dtype
    else:
        out = tail_out.reshape(orig_shape)

    new_state = dict(state)
    new_state.update(
        iter_count=iter_count,
        tracked_min_biased=tmin_b, tracked_min=tmin,
        tracked_max_biased=tmax_b, tracked_max=tmax,
        scale=scale, zero_point=zero_point,
    )
    return out, new_state


# ---------------------------------------------------------------------------
# Pure-JAX reference (correctness sanity check).
# ---------------------------------------------------------------------------
def _reference(x, state, num_bits=8):
    x = x.astype(jnp.float32)
    cmin, cmax = jnp.min(x), jnp.max(x)
    step = state["iter_count"] + 1.0
    decay = state["ema_decay"]
    _, tmin = update_ema(state["tracked_min_biased"], cmin, decay, step)
    _, tmax = update_ema(state["tracked_max_biased"], cmax, decay, step)
    max_abs = jnp.maximum(jnp.abs(tmin), jnp.abs(tmax))
    n_levels = float(2 ** (num_bits - 1) - 1)
    sat_val = jnp.where(max_abs == 0.0, n_levels, max_abs)
    scale = n_levels / sat_val
    xc = jnp.clip(x, -max_abs, max_abs)
    q = jnp.round(scale * xc)
    return q / scale


if __name__ == "__main__":
    key = jax.random.PRNGKey(0)
    x = jax.random.normal(key, (2, 4, 16, 16), dtype=jnp.float32)  # NCHW

    state = init_state(ema_decay=0.999)
    fwd = jax.jit(fake_linear_quantization_forward)
    out, new_state = fwd(x, state)
    out = jax.block_until_ready(out)

    ref = _reference(x, state, num_bits=8)
    np.testing.assert_allclose(np.asarray(out), np.asarray(ref), rtol=1e-5, atol=1e-5)

    print("KERNEL_OK")
</pallas_src>

<mosaic_0001>
module attributes {stable_mosaic.version = 11 : i64} {
  func.func @kernel(%arg0: i32, %arg1: i32, %arg2: memref<6xf32, #tpu.memory_space<smem>>, %arg3: memref<2x1024xf32, #tpu.memory_space<vmem>>, %arg4: memref<2x1024xf32, #tpu.memory_space<vmem>>, %arg5: memref<8x128xf32, #tpu.memory_space<vmem>>, %arg6: memref<8x128xf32, #tpu.memory_space<vmem>>, %arg7: memref<8x1024xf32, #tpu.memory_space<vmem>>, %arg8: memref<8x1024xf32, #tpu.memory_space<vmem>>, %arg9: memref<4xf32, #tpu.memory_space<smem>>) attributes {dimension_semantics = [#tpu.dimension_semantics<arbitrary>, #tpu.dimension_semantics<arbitrary>], iteration_bounds = array<i64: 2, 1>, scalar_prefetch = 0 : i64, scratch_operands = 3 : i64, tpu.core_type = #tpu.core_type<tc>, window_params = [{transform_indices = @transform_0, window_bounds = array<i64: 6>}, {transform_indices = @transform_1, window_bounds = array<i64: 2, 1024>}, {transform_indices = @transform_2, window_bounds = array<i64: 2, 1024>}, {pipeline_mode = #tpu.pipeline_mode<synchronous>, transform_indices = @transform_3, window_bounds = array<i64: 8, 128>}, {pipeline_mode = #tpu.pipeline_mode<synchronous>, transform_indices = @transform_4, window_bounds = array<i64: 8, 128>}]} {
    %c0_i32 = arith.constant 0 : i32
    %0 = arith.cmpi eq, %arg0, %c0_i32 : i32
    %1 = arith.extui %0 : i1 to i32
    %c0_i32_0 = arith.constant 0 : i32
    %2 = arith.cmpi ne, %1, %c0_i32_0 : i32
    scf.if %2 {
      %c0_i32_2 = arith.constant 0 : i32
      %6 = arith.cmpi eq, %arg1, %c0_i32_2 : i32
      %7 = arith.extui %6 : i1 to i32
      %c0_i32_3 = arith.constant 0 : i32
      %8 = arith.cmpi ne, %7, %c0_i32_3 : i32
      scf.if %8 {
        %cst_16 = arith.constant 0x7F800000 : f32
        %25 = vector.broadcast %cst_16 : f32 to vector<8x1024xf32>
        %c0_17 = arith.constant 0 : index
        %c0_18 = arith.constant 0 : index
        %26 = vector.load %arg7[%c0_17, %c0_18] : memref<8x1024xf32, #tpu.memory_space<vmem>>, vector<8x1024xf32>
        tpu.vector_store %arg7[%c0_17, %c0_18], %25 {strides = array<i32>} : memref<8x1024xf32, #tpu.memory_space<vmem>>, vector<8x1024xf32>,
        %cst_19 = arith.constant 0xFF800000 : f32
        %27 = vector.broadcast %cst_19 : f32 to vector<8x1024xf32>
        %c0_20 = arith.constant 0 : index
        %c0_21 = arith.constant 0 : index
        %28 = vector.load %arg8[%c0_20, %c0_21] : memref<8x1024xf32, #tpu.memory_space<vmem>>, vector<8x1024xf32>
        tpu.vector_store %arg8[%c0_20, %c0_21], %27 {strides = array<i32>} : memref<8x1024xf32, #tpu.memory_space<vmem>>, vector<8x1024xf32>,
      } else {
      }
      %c0 = arith.constant 0 : index
      %c0_4 = arith.constant 0 : index
      %9 = vector.load %arg3[%c0, %c0_4] : memref<2x1024xf32, #tpu.memory_space<vmem>>, vector<2x1024xf32>
      %cst = arith.constant dense<0x7F800000> : vector<1024xf32>
      %10 = vector.multi_reduction <minimumf>, %9, %cst [0] : vector<2x1024xf32> to vector<1024xf32>
      %11 = vector.shape_cast %10 : vector<1024xf32> to vector<1x1024xf32>
      %cst_5 = arith.constant dense<0xFF800000> : vector<1024xf32>
      %12 = vector.multi_reduction <maximumf>, %9, %cst_5 [0] : vector<2x1024xf32> to vector<1024xf32>
      %13 = vector.shape_cast %12 : vector<1024xf32> to vector<1x1024xf32>
      %c0_6 = arith.constant 0 : index
      %c0_7 = arith.constant 0 : index
      %14 = vector.load %arg7[%c0_6, %c0_7] : memref<8x1024xf32, #tpu.memory_space<vmem>>, vector<8x1024xf32>
      %15 = vector.broadcast %11 : vector<1x1024xf32> to vector<8x1024xf32>
      %16 = arith.minimumf %14, %15 : vector<8x1024xf32>
      %c0_8 = arith.constant 0 : index
      %c0_9 = arith.constant 0 : index
      %17 = vector.load %arg7[%c0_8, %c0_9] : memref<8x1024xf32, #tpu.memory_space<vmem>>, vector<8x1024xf32>
      tpu.vector_store %arg7[%c0_8, %c0_9], %16 {strides = array<i32>} : memref<8x1024xf32, #tpu.memory_space<vmem>>, vector<8x1024xf32>,
      %c0_10 = arith.constant 0 : index
      %c0_11 = arith.constant 0 : index
      %18 = vector.load %arg8[%c0_10, %c0_11] : memref<8x1024xf32, #tpu.memory_space<vmem>>, vector<8x1024xf32>
      %19 = vector.broadcast %13 : vector<1x1024xf32> to vector<8x1024xf32>
      %20 = arith.maximumf %18, %19 : vector<8x1024xf32>
      %c0_12 = arith.constant 0 : index
      %c0_13 = arith.constant 0 : index
      %21 = vector.load %arg8[%c0_12, %c0_13] : memref<8x1024xf32, #tpu.memory_space<vmem>>, vector<8x1024xf32>
      tpu.vector_store %arg8[%c0_12, %c0_13], %20 {strides = array<i32>} : memref<8x1024xf32, #tpu.memory_space<vmem>>, vector<8x1024xf32>,
      %c0_i32_14 = arith.constant 0 : i32
      %22 = arith.cmpi eq, %arg1, %c0_i32_14 : i32
      %23 = arith.extui %22 : i1 to i32
      %c0_i32_15 = arith.constant 0 : i32
      %24 = arith.cmpi ne, %23, %c0_i32_15 : i32
      scf.if %24 {
        %c0_16 = arith.constant 0 : index
        %c0_17 = arith.constant 0 : index
        %25 = vector.load %arg7[%c0_16, %c0_17] : memref<8x1024xf32, #tpu.memory_space<vmem>>, vector<8x1024xf32>
        %26 = vector.shape_cast %25 : vector<8x1024xf32> to vector<1x8x1024xf32>
        %cst_18 = arith.constant dense<0x7F800000> : vector<1xf32>
        %27 = vector.multi_reduction <minimumf>, %26, %cst_18 [1, 2] : vector<1x8x1024xf32> to vector<1xf32>
        %28 = vector.shape_cast %27 : vector<1xf32> to vector<1x1x1xf32>
        %29 = vector.extract %28[0, 0, 0] : f32 from vector<1x1x1xf32>
        %c4 = arith.constant 4 : index
        %30 = memref.load %arg2[%c4] : memref<6xf32, #tpu.memory_space<smem>>
        %31 = arith.minimumf %29, %30 : f32
        %c0_19 = arith.constant 0 : index
        %c0_20 = arith.constant 0 : index
        %32 = vector.load %arg8[%c0_19, %c0_20] : memref<8x1024xf32, #tpu.memory_space<vmem>>, vector<8x1024xf32>
        %33 = vector.shape_cast %32 : vector<8x1024xf32> to vector<1x8x1024xf32>
        %cst_21 = arith.constant dense<0xFF800000> : vector<1xf32>
        %34 = vector.multi_reduction <maximumf>, %33, %cst_21 [1, 2] : vector<1x8x1024xf32> to vector<1xf32>
        %35 = vector.shape_cast %34 : vector<1xf32> to vector<1x1x1xf32>
        %36 = vector.extract %35[0, 0, 0] : f32 from vector<1x1x1xf32>
        %c5 = arith.constant 5 : index
        %37 = memref.load %arg2[%c5] : memref<6xf32, #tpu.memory_space<smem>>
        %38 = arith.maximumf %36, %37 : f32
        %39 = vector.broadcast %31 : f32 to vector<8x128xf32>
        %c0_22 = arith.constant 0 : index
        %c0_23 = arith.constant 0 : index
        %40 = vector.load %arg5[%c0_22, %c0_23] : memref<8x128xf32, #tpu.memory_space<vmem>>, vector<8x128xf32>
        tpu.vector_store %arg5[%c0_22, %c0_23], %39 {strides = array<i32>} : memref<8x128xf32, #tpu.memory_space<vmem>>, vector<8x128xf32>,
        %41 = vector.broadcast %38 : f32 to vector<8x128xf32>
        %c0_24 = arith.constant 0 : index
        %c0_25 = arith.constant 0 : index
        %42 = vector.load %arg6[%c0_24, %c0_25] : memref<8x128xf32, #tpu.memory_space<vmem>>, vector<8x128xf32>
        tpu.vector_store %arg6[%c0_24, %c0_25], %41 {strides = array<i32>} : memref<8x128xf32, #tpu.memory_space<vmem>>, vector<8x128xf32>,
        %c2 = arith.constant 2 : index
        %43 = memref.load %arg2[%c2] : memref<6xf32, #tpu.memory_space<smem>>
        %c3 = arith.constant 3 : index
        %44 = memref.load %arg2[%c3] : memref<6xf32, #tpu.memory_space<smem>>
        %c0_26 = arith.constant 0 : index
        %45 = memref.load %arg2[%c0_26] : memref<6xf32, #tpu.memory_space<smem>>
        %46 = arith.mulf %45, %43 : f32
        %cst_27 = arith.constant 1.000000e+00 : f32
        %47 = arith.subf %cst_27, %43 : f32
        %48 = arith.mulf %47, %31 : f32
        %49 = arith.addf %46, %48 : f32
        %50 = arith.mulf %49, %44 : f32
        %c1 = arith.constant 1 : index
        %51 = memref.load %arg2[%c1] : memref<6xf32, #tpu.memory_space<smem>>
        %52 = arith.mulf %51, %43 : f32
        %cst_28 = arith.constant 1.000000e+00 : f32
        %53 = arith.subf %cst_28, %43 : f32
        %54 = arith.mulf %53, %38 : f32
        %55 = arith.addf %52, %54 : f32
        %56 = arith.mulf %55, %44 : f32
        %57 = math.absf %50 : f32
        %58 = math.absf %56 : f32
        %59 = arith.maximumf %57, %58 : f32
        %cst_29 = arith.constant 0.000000e+00 : f32
        %60 = arith.cmpf oeq, %59, %cst_29 : f32
        %cst_30 = arith.constant 1.270000e+02 : f32
        %61 = arith.select %60, %cst_30, %59 : f32
        %62 = vector.broadcast %61 : f32 to vector<8x128xf32>
        %cst_31 = arith.constant 1.270000e+02 : f32
        %63 = vector.broadcast %cst_31 : f32 to vector<8x128xf32>
        %64 = arith.divf %63, %62 : vector<8x128xf32>
        %cst_32 = arith.constant 0.000000e+00 : f32
        %65 = arith.subf %cst_32, %59 : f32
        %c0_33 = arith.constant 0 : index
        %66 = memref.load %arg9[%c0_33] : memref<4xf32, #tpu.memory_space<smem>>
        memref.store %65, %arg9[%c0_33] : memref<4xf32, #tpu.memory_space<smem>>
        %c1_34 = arith.constant 1 : index
        %67 = memref.load %arg9[%c1_34] : memref<4xf32, #tpu.memory_space<smem>>
        memref.store %59, %arg9[%c1_34] : memref<4xf32, #tpu.memory_space<smem>>
        %68 = vector.shape_cast %64 : vector<8x128xf32> to vector<1x8x128xf32>
        %cst_35 = arith.constant dense<0xFF800000> : vector<1xf32>
        %69 = vector.multi_reduction <maximumf>, %68, %cst_35 [1, 2] : vector<1x8x128xf32> to vector<1xf32>
        %70 = vector.shape_cast %69 : vector<1xf32> to vector<1x1x1xf32>
        %71 = vector.extract %70[0, 0, 0] : f32 from vector<1x1x1xf32>
        %c2_36 = arith.constant 2 : index
        %72 = memref.load %arg9[%c2_36] : memref<4xf32, #tpu.memory_space<smem>>
        memref.store %71, %arg9[%c2_36] : memref<4xf32, #tpu.memory_space<smem>>
        %cst_37 = arith.constant 1.000000e+00 : f32
        %73 = vector.broadcast %cst_37 : f32 to vector<8x128xf32>
        %74 = arith.divf %73, %64 : vector<8x128xf32>
        %75 = vector.shape_cast %74 : vector<8x128xf32> to vector<1x8x128xf32>
        %cst_38 = arith.constant dense<0xFF800000> : vector<1xf32>
        %76 = vector.multi_reduction <maximumf>, %75, %cst_38 [1, 2] : vector<1x8x128xf32> to vector<1xf32>
        %77 = vector.shape_cast %76 : vector<1xf32> to vector<1x1x1xf32>
        %78 = vector.extract %77[0, 0, 0] : f32 from vector<1x1x1xf32>
        %c3_39 = arith.constant 3 : index
        %79 = memref.load %arg9[%c3_39] : memref<4xf32, #tpu.memory_space<smem>>
        memref.store %78, %arg9[%c3_39] : memref<4xf32, #tpu.memory_space<smem>>
      } else {
      }
    } else {
    }
    %c1_i32 = arith.constant 1 : i32
    %3 = arith.cmpi eq, %arg0, %c1_i32 : i32
    %4 = arith.extui %3 : i1 to i32
    %c0_i32_1 = arith.constant 0 : i32
    %5 = arith.cmpi ne, %4, %c0_i32_1 : i32
    scf.if %5 {
      %c0 = arith.constant 0 : index
      %c0_2 = arith.constant 0 : index
      %6 = vector.load %arg3[%c0, %c0_2] : memref<2x1024xf32, #tpu.memory_space<vmem>>, vector<2x1024xf32>
      %c0_3 = arith.constant 0 : index
      %7 = memref.load %arg9[%c0_3] : memref<4xf32, #tpu.memory_space<smem>>
      %c1 = arith.constant 1 : index
      %8 = memref.load %arg9[%c1] : memref<4xf32, #tpu.memory_space<smem>>
      %9 = vector.broadcast %7 : f32 to vector<2x1024xf32>
      %10 = arith.maximumf %9, %6 : vector<2x1024xf32>
      %11 = vector.broadcast %8 : f32 to vector<2x1024xf32>
      %12 = arith.minimumf %11, %10 : vector<2x1024xf32>
      %c2 = arith.constant 2 : index
      %13 = memref.load %arg9[%c2] : memref<4xf32, #tpu.memory_space<smem>>
      %14 = vector.broadcast %13 : f32 to vector<2x1024xf32>
      %15 = arith.mulf %14, %12 : vector<2x1024xf32>
      %16 = math.roundeven %15 : vector<2x1024xf32>
      %c3 = arith.constant 3 : index
      %17 = memref.load %arg9[%c3] : memref<4xf32, #tpu.memory_space<smem>>
      %18 = vector.broadcast %17 : f32 to vector<2x1024xf32>
      %19 = arith.mulf %16, %18 : vector<2x1024xf32>
      %c0_4 = arith.constant 0 : index
      %c0_5 = arith.constant 0 : index
      %20 = vector.load %arg4[%c0_4, %c0_5] : memref<2x1024xf32, #tpu.memory_space<vmem>>, vector<2x1024xf32>
      tpu.vector_store %arg4[%c0_4, %c0_5], %19 {strides = array<i32>} : memref<2x1024xf32, #tpu.memory_space<vmem>>, vector<2x1024xf32>,
    } else {
    }
    return
  }
  func.func @transform_0(%arg0: i32, %arg1: i32) -> i32 {
    %c0_i32 = arith.constant 0 : i32
    %c0_i32_0 = arith.constant 0 : i32
    return %c0_i32 : i32
  }
  func.func @transform_1(%arg0: i32, %arg1: i32) -> (i32, i32) {
    %c0_i32 = arith.constant 0 : i32
    %c0_i32_0 = arith.constant 0 : i32
    return %arg1, %c0_i32 : i32, i32
  }
  func.func @transform_2(%arg0: i32, %arg1: i32) -> (i32, i32) {
    %0 = arith.muli %arg1, %arg0 : i32
    %c0_i32 = arith.constant 0 : i32
    %c0_i32_0 = arith.constant 0 : i32
    return %0, %c0_i32 : i32, i32
  }
  func.func @transform_3(%arg0: i32, %arg1: i32) -> (i32, i32) {
    %c0_i32 = arith.constant 0 : i32
    %c0_i32_0 = arith.constant 0 : i32
    %c0_i32_1 = arith.constant 0 : i32
    return %c0_i32, %c0_i32_0 : i32, i32
  }
  func.func @transform_4(%arg0: i32, %arg1: i32) -> (i32, i32) {
    %c0_i32 = arith.constant 0 : i32
    %c0_i32_0 = arith.constant 0 : i32
    %c0_i32_1 = arith.constant 0 : i32
    return %c0_i32, %c0_i32_0 : i32, i32
  }
}

</mosaic_0001>

<llo_original>
// kernel: fake_linear_quantization_forward.1
$region0: #{fake_linear_quantization_forward.1}
  #allocation0 [shape = 'u32[]', space=smem, size = 0x4, offset = 0x4, fixed_abs, tag = 'smem constant byte address 0x4 - core index']
  #allocation1 [shape = 'u32[72,128]{1,0:T(1,128)}', space=vmem, size = 0x9000, scoped, tag = 'internal scratch']
  #allocation2 [shape = 'f32[8,1024]{1,0:T(8,128)}', space=vmem, size = 0x8000, scoped, tag = 'scratch operand']
  #allocation3 [shape = 'f32[8,1024]{1,0:T(8,128)}', space=vmem, size = 0x8000, scoped, tag = 'scratch operand']
  #allocation4 [shape = 'f32[4]{0:T(128)}', space=smem, size = 0x200, scoped, tag = 'scratch operand']
  %s0 = inlined_call_operand.vmem [shape: f32[6], index: 0, kind: input, shape index: {}]
  %s1 = inlined_call_operand.vmem [shape: f32[2,1024], index: 1, kind: input, shape index: {}]
  %s2 = inlined_call_operand.vmem [shape: f32[2,1024], index: 2, kind: output, shape index: {0}]
  %s3 = inlined_call_operand.vmem [shape: f32[8,128], index: 3, kind: output, shape index: {1}]
  %s4 = inlined_call_operand.vmem [shape: f32[8,128], index: 4, kind: output, shape index: {2}]
  %5 = xla_tuple %s2, %s3, %s4
  %s6 = sld [smem:[#allocation0]]
  $region77: #{fake_linear_quantization_forward.1} parent=0
    _
  %s8 = ssub.s32 1, %s6
  %s9 = scalar_select 0, %s8, %s6
  $region1: #{fake_linear_quantization_forward.1} parent=0
    #allocation5 [shape = 'u8[512]{0}', space=smem, size = 0x200, scoped, tag = 'input window, operand 0, single buffered']
    #allocation6 [shape = 's32[2]{0}', space=sflag, size = 0x8, scoped, tag = 'scoped memory for fake_linear_quantization_forward.1']
    %10 = vsyncpa [#allocation6], 0
    loop: start=0, step=1, limit=4
    $region2: #{fake_linear_quantization_forward.1} parent=1 // loop_pre_header
      _
    $region3: #{fake_linear_quantization_forward.1} parent=1 // loop_header
      %s12 = sphi 0, %s16
      %p13 = scmp.ge.s32.totalorder %s12, 4
      %s19 = sphi 0, %s31
      %s20 = sphi 0, %s27
      %s21 = sphi 0, %s19
      %s22 = sphi 0, %s20
      %s23 = sphi 0, %s21
      %s24 = sphi 0, %s22
      %s32 = sphi 0, %s32
      %s34 = sphi 0, %s32
      %s35 = sphi 0, %s34
      %s49 = sphi 0, %s35
      %s55 = sphi 0, %s57
      %s58 = sphi 0, %s55
      %s59 = sphi 0, %s58
      %s75 = sphi 0, %s59
      %s83 = sphi 0, %s85
      %s86 = sphi 0, %s83
      %s87 = sphi 0, %s86
      %s103 = sphi 0, %s87
      %s107 = sphi 0, %s107
      %s109 = sphi 0, %s107
      %s110 = sphi 0, %s109
      %s124 = sphi 0, %s110
      %s128 = sphi 0, %s128
      %s130 = sphi 0, %s128
      %s131 = sphi 0, %s130
      %s145 = sphi 0, %s131
    $region4: #{fake_linear_quantization_forward.1} parent=1 // loop_header_branch
      %15 = sbr.rel (%p13) target = $region8
    $region5: #{fake_linear_quantization_forward.1} parent=1 // loop_body
      %s17 = ssub.s32 %s12, 1
      %s18 = ssub.s32 %s12, 2
      %s25 = sadd.s32 1, %s20
      %p26 = scmp.ge.s32.totalorder %s25, 1
      %s27 = scalar_select %p26, 0, %s25
      %s28 = sadd.s32 1, %s19
      %s29 = scalar_select %p26, %s28, %s19
      %p30 = scmp.ge.s32.totalorder %s29, 2
      %s31 = scalar_select %p30, 0, %s29
      %s33 = sadd.s32 %s32, 1
      %p36 = scmp.eq.s32.totalorder %s12, 1
      %p37 = scmp.ne.s32.totalorder %s32, %s34
      %p38 = scmp.eq.s32.totalorder %s12, 0
      %p39 = por %p37, %p38
      %p40 = scmp.ne.s32.totalorder %s32, %s34
      %p41 = scmp.eq.s32.totalorder %s17, 1
      %p42 = por %p40, %p41
      %p43 = scmp.ne.s32.totalorder %s34, %s35
      %p44 = scmp.eq.s32.totalorder %s17, 0
      %p45 = por %p43, %p44
      %p46 = scmp.ne.s32.totalorder %s34, %s35
      %p47 = scmp.eq.s32.totalorder %s18, 1
      %p48 = por %p46, %p47
      %p50 = scmp.ne.s32.totalorder %s35, %s49
      %p51 = scmp.eq.s32.totalorder %s18, 0
      %p52 = por %p50, %p51
      %s53 = ssub.s32 %s20, %s27
      %p54 = scmp.eq.s32.totalorder %s53, 0
      %s56 = sadd.s32 %s55, 1
      %s57 = scalar_select %p54, %s55, %s56
      %p60 = pneg %p54
      %p61 = scmp.eq.s32.totalorder %s12, 1
      %p62 = por %p60, %p61
      %p63 = scmp.ne.s32.totalorder %s55, %s58
      %p64 = scmp.eq.s32.totalorder %s12, 0
      %p65 = por %p63, %p64
      %p66 = scmp.ne.s32.totalorder %s55, %s58
      %p67 = scmp.eq.s32.totalorder %s17, 1
      %p68 = por %p66, %p67
      %p69 = scmp.ne.s32.totalorder %s58, %s59
      %p70 = scmp.eq.s32.totalorder %s17, 0
      %p71 = por %p69, %p70
      %p72 = scmp.ne.s32.totalorder %s58, %s59
      %p73 = scmp.eq.s32.totalorder %s18, 1
      %p74 = por %p72, %p73
      %p76 = scmp.ne.s32.totalorder %s59, %s75
      %p77 = scmp.eq.s32.totalorder %s18, 0
      %p78 = por %p76, %p77
      %s79 = smul.u32 %s20, %s19
      %s80 = smul.u32 %s27, %s31
      %s81 = ssub.s32 %s79, %s80
      %p82 = scmp.eq.s32.totalorder %s81, 0
      %s84 = sadd.s32 %s83, 1
      %s85 = scalar_select %p82, %s83, %s84
      %p88 = pneg %p82
      %p89 = scmp.eq.s32.totalorder %s12, 1
      %p90 = por %p88, %p89
      %p91 = scmp.ne.s32.totalorder %s83, %s86
      %p92 = scmp.eq.s32.totalorder %s12, 0
      %p93 = por %p91, %p92
      %p94 = scmp.ne.s32.totalorder %s83, %s86
      %p95 = scmp.eq.s32.totalorder %s17, 1
      %p96 = por %p94, %p95
      %p97 = scmp.ne.s32.totalorder %s86, %s87
      %p98 = scmp.eq.s32.totalorder %s17, 0
      %p99 = por %p97, %p98
      %p100 = scmp.ne.s32.totalorder %s86, %s87
      %p101 = scmp.eq.s32.totalorder %s18, 1
      %p102 = por %p100, %p101
      %p104 = scmp.ne.s32.totalorder %s87, %s103
      %p105 = scmp.eq.s32.totalorder %s18, 0
      %p106 = por %p104, %p105
      %s108 = sadd.s32 %s107, 1
      %p111 = scmp.eq.s32.totalorder %s12, 1
      %p112 = scmp.ne.s32.totalorder %s107, %s109
      %p113 = scmp.eq.s32.totalorder %s12, 0
      %p114 = por %p112, %p113
      %p115 = scmp.ne.s32.totalorder %s107, %s109
      %p116 = scmp.eq.s32.totalorder %s17, 1
      %p117 = por %p115, %p116
      %p118 = scmp.ne.s32.totalorder %s109, %s110
      %p119 = scmp.eq.s32.totalorder %s17, 0
      %p120 = por %p118, %p119
      %p121 = scmp.ne.s32.totalorder %s109, %s110
      %p122 = scmp.eq.s32.totalorder %s18, 1
      %p123 = por %p121, %p122
      %p125 = scmp.ne.s32.totalorder %s110, %s124
      %p126 = scmp.eq.s32.totalorder %s18, 0
      %p127 = por %p125, %p126
      %s129 = sadd.s32 %s128, 1
      %p132 = scmp.eq.s32.totalorder %s12, 1
      %p133 = scmp.ne.s32.totalorder %s128, %s130
      %p134 = scmp.eq.s32.totalorder %s12, 0
      %p135 = por %p133, %p134
      %p136 = scmp.ne.s32.totalorder %s128, %s130
      %p137 = scmp.eq.s32.totalorder %s17, 1
      %p138 = por %p136, %p137
      %p139 = scmp.ne.s32.totalorder %s130, %s131
      %p140 = scmp.eq.s32.totalorder %s17, 0
      %p141 = por %p139, %p140
      %p142 = scmp.ne.s32.totalorder %s130, %s131
      %p143 = scmp.eq.s32.totalorder %s18, 1
      %p144 = por %p142, %p143
      %p146 = scmp.ne.s32.totalorder %s131, %s145
      %p147 = scmp.eq.s32.totalorder %s18, 0
      %p148 = por %p146, %p147
      %p149 = scmp.le.s32.totalorder 1, %s12
      %p150 = scmp.lt.s32.totalorder %s12, 3
      %p151 = pnand %p149, %p150
      %p152 = pneg %p151
      // Predicated region
      $region9: #{fake_linear_quantization_forward.1} parent=5 // pred_check
        _
      $region10: #{fake_linear_quantization_forward.1} parent=5 // pred_check_branch
        %154 = sbr.rel (%p151) target = $region12
      $region11: #{fake_linear_quantization_forward.1} parent=5 // pred_region
        %s155 = ssub.s32 %s12, 1
        // Predicated region
        $region13: #{fake_linear_quantization_forward.1} parent=11 // pred_check
          %p156 = pneg %p45
        $region14: #{fake_linear_quantization_forward.1} parent=11 // pred_check_branch
          %158 = sbr.rel (%p156) target = $region16
        $region15: #{fake_linear_quantization_forward.1} parent=11 // pred_region
          %160 = vsyncadd [#allocation6], 0
          %s162 = sshll.u32 %s0, 4
          %s163 = int_to_ptr.vmem [resolvable:$true] %s162
          %165 = dma.vmem_to_smem %s163, 16, [#allocation5], [#allocation6]
        $region16: #{fake_linear_quantization_forward.1} parent=11 // pred_fallthru
          _
        // Predicated region
        $region17: #{fake_linear_quantization_forward.1} parent=11 // pred_check
          %p166 = pneg %p71
        $region18: #{fake_linear_quantization_forward.1} parent=11 // pred_check_branch
          %168 = sbr.rel (%p166) target = $region20
        $region19: #{fake_linear_quantization_forward.1} parent=11 // pred_region
          %p169 = scmp.lt.s32.totalorder %s22, 0
          %s170 = scalar_select %p169, %s22, 0
          %s171 = smul.addr %s170, 8
          %s172 = smul.addr %s171, 2
          %s173 = scalar_lea.vmem %s1, %s172
        $region20: #{fake_linear_quantization_forward.1} parent=11 // pred_fallthru
          _
      $region12: #{fake_linear_quantization_forward.1} parent=5 // pred_fallthru
        _
      %p174 = scmp.lt.s32.totalorder %s12, 2
      // Predicated region
      $region21: #{fake_linear_quantization_forward.1} parent=5 // pred_check
        %p175 = pneg %p174
      $region22: #{fake_linear_quantization_forward.1} parent=5 // pred_check_branch
        %177 = sbr.rel (%p175) target = $region24
      $region23: #{fake_linear_quantization_forward.1} parent=5 // pred_region
        _
      $region24: #{fake_linear_quantization_forward.1} parent=5 // pred_fallthru
        _
      %p178 = scmp.le.s32.totalorder 1, %s12
      %p179 = scmp.lt.s32.totalorder %s12, 3
      %p180 = pnand %p178, %p179
      %p181 = pneg %p180
      // Predicated region
      $region25: #{fake_linear_quantization_forward.1} parent=5 // pred_check
        _
      $region26: #{fake_linear_quantization_forward.1} parent=5 // pred_check_branch
        %183 = sbr.rel (%p180) target = $region28
      $region27: #{fake_linear_quantization_forward.1} parent=5 // pred_region
        %s184 = ssub.s32 %s12, 1
        // Predicated region
        $region29: #{fake_linear_quantization_forward.1} parent=27 // pred_check
          %p185 = pneg %p45
        $region30: #{fake_linear_quantization_forward.1} parent=27 // pred_check_branch
          %187 = sbr.rel (%p185) target = $region32
        $region31: #{fake_linear_quantization_forward.1} parent=27 // pred_region
          %189 = dma.done [#allocation6], 16
        $region32: #{fake_linear_quantization_forward.1} parent=27 // pred_fallthru
          _
        %190 = sfence
        %p191 = pneg %p45
        %p192 = pneg %p42
        %p193 = scmp.lt.s32.totalorder %s22, 0
        %s194 = scalar_select %p193, %s22, 0
        %s195 = smul.addr %s194, 8
        %s196 = smul.addr %s195, 2
        %s197 = scalar_lea.vmem %s1, %s196
        %p198 = pneg %p71
        %p199 = pneg %p68
        %p200 = pneg %p99
        %p201 = pneg %p96
        %s202 = smul.u32 %s22, %s21
        %p203 = scmp.lt.s32.totalorder %s202, 0
        %s204 = scalar_select %p203, %s202, 0
        %s205 = smul.addr %s204, 8
        %s206 = smul.addr %s205, 2
        %s207 = scalar_lea.vmem %s2, %s206
        %p208 = pneg %p120
        %p209 = pneg %p117
        %p210 = pneg %p141
        %p211 = pneg %p138
        %p212 = scmp.lt.s32.totalorder %s22, 0
        %s213 = scalar_select %p212, %s22, 0
        %s214 = smul.addr %s213, 8
        %s215 = smul.addr %s214, 2
        %s216 = scalar_lea.vmem %s1, %s215
        %s217 = smul.u32 %s22, %s21
        %p218 = scmp.lt.s32.totalorder %s217, 0
        %s219 = scalar_select %p218, %s217, 0
        %s220 = smul.addr %s219, 8
        %s221 = smul.addr %s220, 2
        %s222 = scalar_lea.vmem %s2, %s221
        %s223 = smul.u32 %s22, %s21
        %p224 = scmp.eq.s32.totalorder %s21, 0
        // Predicated region
        $region33: #{fake_linear_quantization_forward.1} parent=27 // pred_check
          %p225 = pneg %p224
        $region34: #{fake_linear_quantization_forward.1} parent=27 // pred_check_branch
          %227 = sbr.rel (%p225) target = $region36
        $region35: #{fake_linear_quantization_forward.1} parent=27 // pred_region
          %p228 = scmp.eq.s32.totalorder %s22, 0
          // Predicated region
          $region37: #{fake_linear_quantization_forward.1} parent=35 // pred_check
            %p229 = pneg %p228
          $region38: #{fake_linear_quantization_forward.1} parent=35 // pred_check_branch
            %231 = sbr.rel (%p229) target = $region40
          $region39: #{fake_linear_quantization_forward.1} parent=35 // pred_region
            %232 = vst [vmem:[#allocation2] sm:$0xff] inf
            %233 = vst [vmem:[#allocation2 + $0x8] sm:$0xff] inf
            %234 = vst [vmem:[#allocation2 + $0x10] sm:$0xff] inf
            %235 = vst [vmem:[#allocation2 + $0x18] sm:$0xff] inf
            %236 = vst [vmem:[#allocation2 + $0x20] sm:$0xff] inf
            %237 = vst [vmem:[#allocation2 + $0x28] sm:$0xff] inf
            %238 = vst [vmem:[#allocation2 + $0x30] sm:$0xff] inf
            %239 = vst [vmem:[#allocation2 + $0x38] sm:$0xff] inf
            %240 = vst [vmem:[#allocation3] sm:$0xff] -inf
            %241 = vst [vmem:[#allocation3 + $0x8] sm:$0xff] -inf
            %242 = vst [vmem:[#allocation3 + $0x10] sm:$0xff] -inf
            %243 = vst [vmem:[#allocation3 + $0x18] sm:$0xff] -inf
            %244 = vst [vmem:[#allocation3 + $0x20] sm:$0xff] -inf
            %245 = vst [vmem:[#allocation3 + $0x28] sm:$0xff] -inf
            %246 = vst [vmem:[#allocation3 + $0x30] sm:$0xff] -inf
            %247 = vst [vmem:[#allocation3 + $0x38] sm:$0xff] -inf
          $region40: #{fake_linear_quantization_forward.1} parent=35 // pred_fallthru
            _
          %v248 = vld [vmem:[%s216] sm:$0xff]
          %v249 = vld [vmem:[%s216 + $0x8] sm:$0xff]
          %252 = vst [vmem:[#allocation1] ss:$4 sm:$0xff] %v248
          %s253 = scalar_lea.vmem [#allocation1], 32
          %254 = vst [vmem:[%s253] ss:$4 sm:$0xff] %v249
          %v255 = vld.sshfl [vmem:[#allocation1] sm:$0xff pattern:$0x73625140]
          %v256 = vld.sshfl [vmem:[#allocation1 + $0x8] sm:$0xff pattern:$0x73625140]
          %v257 = vld.sshfl [vmem:[#allocation1 + $0x10] sm:$0xff pattern:$0x73625140]
          %v258 = vld.sshfl [vmem:[#allocation1 + $0x18] sm:$0xff pattern:$0x73625140]
          %v259 = vld.sshfl [vmem:[#allocation1 + $0x20] sm:$0xff pattern:$0x73625140]
          %v260 = vld.sshfl [vmem:[#allocation1 + $0x28] sm:$0xff pattern:$0x73625140]
          %v261 = vld.sshfl [vmem:[#allocation1 + $0x30] sm:$0xff pattern:$0x73625140]
          %v262 = vld.sshfl [vmem:[#allocation1 + $0x38] sm:$0xff pattern:$0x73625140]
          %vm271 = vcmask 1041408
          %v272 = vsel %vm271, %v255, inf
          %v273 = vrot.slane %v272, 4
          %v274 = vmin.f32 %v272, %v273
          %v275 = vrot.slane %v274, 2
          %v276 = vmin.f32 %v274, %v275
          %v277 = vrot.slane %v276, 1
          %v278 = vmin.f32 %v276, %v277
          %v279 = vsel %vm271, %v256, inf
          %v280 = vrot.slane %v279, 4
          %v281 = vmin.f32 %v279, %v280
          %v282 = vrot.slane %v281, 2
          %v283 = vmin.f32 %v281, %v282
          %v284 = vrot.slane %v283, 1
          %v285 = vmin.f32 %v283, %v284
          %v286 = vsel %vm271, %v257, inf
          %v287 = vrot.slane %v286, 4
          %v288 = vmin.f32 %v286, %v287
          %v289 = vrot.slane %v288, 2
          %v290 = vmin.f32 %v288, %v289
          %v291 = vrot.slane %v290, 1
          %v292 = vmin.f32 %v290, %v291
          %v293 = vsel %vm271, %v258, inf
          %v294 = vrot.slane %v293, 4
          %v295 = vmin.f32 %v293, %v294
          %v296 = vrot.slane %v295, 2
          %v297 = vmin.f32 %v295, %v296
          %v298 = vrot.slane %v297, 1
          %v299 = vmin.f32 %v297, %v298
          %v300 = vsel %vm271, %v259, inf
          %v301 = vrot.slane %v300, 4
          %v302 = vmin.f32 %v300, %v301
          %v303 = vrot.slane %v302, 2
          %v304 = vmin.f32 %v302, %v303
          %v305 = vrot.slane %v304, 1
          %v306 = vmin.f32 %v304, %v305
          %v307 = vsel %vm271, %v260, inf
          %v308 = vrot.slane %v307, 4
          %v309 = vmin.f32 %v307, %v308
          %v310 = vrot.slane %v309, 2
          %v311 = vmin.f32 %v309, %v310
          %v312 = vrot.slane %v311, 1
          %v313 = vmin.f32 %v311, %v312
          %v314 = vsel %vm271, %v261, inf
          %v315 = vrot.slane %v314, 4
          %v316 = vmin.f32 %v314, %v315
          %v317 = vrot.slane %v316, 2
          %v318 = vmin.f32 %v316, %v317
          %v319 = vrot.slane %v318, 1
          %v320 = vmin.f32 %v318, %v319
          %v321 = vsel %vm271, %v262, inf
          %v322 = vrot.slane %v321, 4
          %v323 = vmin.f32 %v321, %v322
          %v324 = vrot.slane %v323, 2
          %v325 = vmin.f32 %v323, %v324
          %v326 = vrot.slane %v325, 1
          %v327 = vmin.f32 %v325, %v326
          %328 = vst [vmem:[#allocation1] ss:$4 sm:$0xff] %v248
          %s329 = scalar_lea.vmem [#allocation1], 32
          %330 = vst [vmem:[%s329] ss:$4 sm:$0xff] %v249
          %v331 = vld.sshfl [vmem:[#allocation1] sm:$0xff pattern:$0x73625140]
          %v332 = vld.sshfl [vmem:[#allocation1 + $0x8] sm:$0xff pattern:$0x73625140]
          %v333 = vld.sshfl [vmem:[#allocation1 + $0x10] sm:$0xff pattern:$0x73625140]
          %v334 = vld.sshfl [vmem:[#allocation1 + $0x18] sm:$0xff pattern:$0x73625140]
          %v335 = vld.sshfl [vmem:[#allocation1 + $0x20] sm:$0xff pattern:$0x73625140]
          %v336 = vld.sshfl [vmem:[#allocation1 + $0x28] sm:$0xff pattern:$0x73625140]
          %v337 = vld.sshfl [vmem:[#allocation1 + $0x30] sm:$0xff pattern:$0x73625140]
          %v338 = vld.sshfl [vmem:[#allocation1 + $0x38] sm:$0xff pattern:$0x73625140]
          %v347 = vsel %vm271, %v331, -inf
          %v348 = vrot.slane %v347, 4
          %v349 = vmax.f32 %v347, %v348
          %v350 = vrot.slane %v349, 2
          %v351 = vmax.f32 %v349, %v350
          %v352 = vrot.slane %v351, 1
          %v353 = vmax.f32 %v351, %v352
          %v354 = vsel %vm271, %v332, -inf
          %v355 = vrot.slane %v354, 4
          %v356 = vmax.f32 %v354, %v355
          %v357 = vrot.slane %v356, 2
          %v358 = vmax.f32 %v356, %v357
          %v359 = vrot.slane %v358, 1
          %v360 = vmax.f32 %v358, %v359
          %v361 = vsel %vm271, %v333, -inf
          %v362 = vrot.slane %v361, 4
          %v363 = vmax.f32 %v361, %v362
          %v364 = vrot.slane %v363, 2
          %v365 = vmax.f32 %v363, %v364
          %v366 = vrot.slane %v365, 1
          %v367 = vmax.f32 %v365, %v366
          %v368 = vsel %vm271, %v334, -inf
          %v369 = vrot.slane %v368, 4
          %v370 = vmax.f32 %v368, %v369
          %v371 = vrot.slane %v370, 2
          %v372 = vmax.f32 %v370, %v371
          %v373 = vrot.slane %v372, 1
          %v374 = vmax.f32 %v372, %v373
          %v375 = vsel %vm271, %v335, -inf
          %v376 = vrot.slane %v375, 4
          %v377 = vmax.f32 %v375, %v376
          %v378 = vrot.slane %v377, 2
          %v379 = vmax.f32 %v377, %v378
          %v380 = vrot.slane %v379, 1
          %v381 = vmax.f32 %v379, %v380
          %v382 = vsel %vm271, %v336, -inf
          %v383 = vrot.slane %v382, 4
          %v384 = vmax.f32 %v382, %v383
          %v385 = vrot.slane %v384, 2
          %v386 = vmax.f32 %v384, %v385
          %v387 = vrot.slane %v386, 1
          %v388 = vmax.f32 %v386, %v387
          %v389 = vsel %vm271, %v337, -inf
          %v390 = vrot.slane %v389, 4
          %v391 = vmax.f32 %v389, %v390
          %v392 = vrot.slane %v391, 2
          %v393 = vmax.f32 %v391, %v392
          %v394 = vrot.slane %v393, 1
          %v395 = vmax.f32 %v393, %v394
          %v396 = vsel %vm271, %v338, -inf
          %v397 = vrot.slane %v396, 4
          %v398 = vmax.f32 %v396, %v397
          %v399 = vrot.slane %v398, 2
          %v400 = vmax.f32 %v398, %v399
          %v401 = vrot.slane %v400, 1
          %v402 = vmax.f32 %v400, %v401
          %v403 = vld [vmem:[#allocation2] sm:$0xff]
          %v404 = vld [vmem:[#allocation2 + $0x8] sm:$0xff]
          %v405 = vld [vmem:[#allocation2 + $0x10] sm:$0xff]
          %v406 = vld [vmem:[#allocation2 + $0x18] sm:$0xff]
          %v407 = vld [vmem:[#allocation2 + $0x20] sm:$0xff]
          %v408 = vld [vmem:[#allocation2 + $0x28] sm:$0xff]
          %v409 = vld [vmem:[#allocation2 + $0x30] sm:$0xff]
          %v410 = vld [vmem:[#allocation2 + $0x38] sm:$0xff]
          %v411 = vmin.f32 %v403, %v278
          %v412 = vmin.f32 %v404, %v285
          %v413 = vmin.f32 %v405, %v292
          %v414 = vmin.f32 %v406, %v299
          %v415 = vmin.f32 %v407, %v306
          %v416 = vmin.f32 %v408, %v313
          %v417 = vmin.f32 %v409, %v320
          %v418 = vmin.f32 %v410, %v327
          %419 = vst [vmem:[#allocation2] sm:$0xff] %v411
          %420 = vst [vmem:[#allocation2 + $0x8] sm:$0xff] %v412
          %421 = vst [vmem:[#allocation2 + $0x10] sm:$0xff] %v413
          %422 = vst [vmem:[#allocation2 + $0x18] sm:$0xff] %v414
          %423 = vst [vmem:[#allocation2 + $0x20] sm:$0xff] %v415
          %424 = vst [vmem:[#allocation2 + $0x28] sm:$0xff] %v416
          %425 = vst [vmem:[#allocation2 + $0x30] sm:$0xff] %v417
          %426 = vst [vmem:[#allocation2 + $0x38] sm:$0xff] %v418
          %v427 = vld [vmem:[#allocation3] sm:$0xff]
          %v428 = vld [vmem:[#allocation3 + $0x8] sm:$0xff]
          %v429 = vld [vmem:[#allocation3 + $0x10] sm:$0xff]
          %v430 = vld [vmem:[#allocation3 + $0x18] sm:$0xff]
          %v431 = vld [vmem:[#allocation3 + $0x20] sm:$0xff]
          %v432 = vld [vmem:[#allocation3 + $0x28] sm:$0xff]
          %v433 = vld [vmem:[#allocation3 + $0x30] sm:$0xff]
          %v434 = vld [vmem:[#allocation3 + $0x38] sm:$0xff]
          %v435 = vmax.f32 %v427, %v353
          %v436 = vmax.f32 %v428, %v360
          %v437 = vmax.f32 %v429, %v367
          %v438 = vmax.f32 %v430, %v374
          %v439 = vmax.f32 %v431, %v381
          %v440 = vmax.f32 %v432, %v388
          %v441 = vmax.f32 %v433, %v395
          %v442 = vmax.f32 %v434, %v402
          %443 = vst [vmem:[#allocation3] sm:$0xff] %v435
          %444 = vst [vmem:[#allocation3 + $0x8] sm:$0xff] %v436
          %445 = vst [vmem:[#allocation3 + $0x10] sm:$0xff] %v437
          %446 = vst [vmem:[#allocation3 + $0x18] sm:$0xff] %v438
          %447 = vst [vmem:[#allocation3 + $0x20] sm:$0xff] %v439
          %448 = vst [vmem:[#allocation3 + $0x28] sm:$0xff] %v440
          %449 = vst [vmem:[#allocation3 + $0x30] sm:$0xff] %v441
          %450 = vst [vmem:[#allocation3 + $0x38] sm:$0xff] %v442
          // Predicated region
          $region41: #{fake_linear_quantization_forward.1} parent=35 // pred_check
            %p451 = pneg %p228
          $region42: #{fake_linear_quantization_forward.1} parent=35 // pred_check_branch
            %453 = sbr.rel (%p451) target = $region44
          $region43: #{fake_linear_quantization_forward.1} parent=35 // pred_region
            %v454 = vld [vmem:[#allocation2] sm:$0xff]
            %v455 = vld [vmem:[#allocation2 + $0x8] sm:$0xff]
            %v456 = vld [vmem:[#allocation2 + $0x10] sm:$0xff]
            %v457 = vld [vmem:[#allocation2 + $0x18] sm:$0xff]
            %v458 = vld [vmem:[#allocation2 + $0x20] sm:$0xff]
            %v459 = vld [vmem:[#allocation2 + $0x28] sm:$0xff]
            %v460 = vld [vmem:[#allocation2 + $0x30] sm:$0xff]
            %v461 = vld [vmem:[#allocation2 + $0x38] sm:$0xff]
            %v462 = vmin.f32 %v454, %v458
            %v463 = vmin.f32 %v455, %v459
            %v464 = vmin.f32 %v456, %v460
            %v465 = vmin.f32 %v457, %v461
            %v466 = vmin.f32 %v462, %v463
            %v467 = vmin.f32 %v464, %v465
            %v468 = vmin.f32 %v466, %v467
            %469 = vmin.xlane.f32.xlu0 %v468
            %v470 = vpop.xlane.xlu0 %469
            %v471 = vrot.slane %v470, 4
            %v472 = vmin.f32 %v470, %v471
            %v473 = vrot.slane %v472, 2
            %v474 = vmin.f32 %v472, %v473
            %v475 = vrot.slane %v474, 1
            %v476 = vmin.f32 %v474, %v475
            %s477 = vtos %v476
            %s478 = sld [smem:[#allocation5 + $0x4]]
            %s479 = smin.f32 %s477, %s478
            %v480 = vld [vmem:[#allocation3] sm:$0xff]
            %v481 = vld [vmem:[#allocation3 + $0x8] sm:$0xff]
            %v482 = vld [vmem:[#allocation3 + $0x10] sm:$0xff]
            %v483 = vld [vmem:[#allocation3 + $0x18] sm:$0xff]
            %v484 = vld [vmem:[#allocation3 + $0x20] sm:$0xff]
            %v485 = vld [vmem:[#allocation3 + $0x28] sm:$0xff]
            %v486 = vld [vmem:[#allocation3 + $0x30] sm:$0xff]
            %v487 = vld [vmem:[#allocation3 + $0x38] sm:$0xff]
            %v488 = vmax.f32 %v480, %v484
            %v489 = vmax.f32 %v481, %v485
            %v490 = vmax.f32 %v482, %v486
            %v491 = vmax.f32 %v483, %v487
            %v492 = vmax.f32 %v488, %v489
            %v493 = vmax.f32 %v490, %v491
            %v494 = vmax.f32 %v492, %v493
            %495 = vmax.xlane.f32.xlu0 %v494
            %v496 = vpop.xlane.xlu0 %495
            %v497 = vrot.slane %v496, 4
            %v498 = vmax.f32 %v496, %v497
            %v499 = vrot.slane %v498, 2
            %v500 = vmax.f32 %v498, %v499
            %v501 = vrot.slane %v500, 1
            %v502 = vmax.f32 %v500, %v501
            %s503 = vtos %v502
            %s504 = sld [smem:[#allocation5 + $0x5]]
            %s505 = smax.f32 %s503, %s504
            %v506 = vstv %s479
            %507 = vst [vmem:[%s3] sm:$0xff] %v506
            %v508 = vstv %s505
            %509 = vst [vmem:[%s4] sm:$0xff] %v508
            %s510 = sld [smem:[#allocation5 + $0x2]]
            %s511 = sld [smem:[#allocation5 + $0x3]]
            %s512 = sld [smem:[#allocation5]]
            %s513 = smul.f32 %s512, %s510
            %s514 = ssub.f32 1.0, %s510
            %s515 = smul.f32 %s514, %s479
            %s516 = sadd.f32 %s513, %s515
            %s517 = smul.f32 %s516, %s511
            %s518 = sld [smem:[#allocation5 + $0x1]]
            %s519 = smul.f32 %s518, %s510
            %s520 = smul.f32 %s514, %s505
            %s521 = sadd.f32 %s519, %s520
            %s522 = smul.f32 %s521, %s511
            %s523 = sand.u32 2147483647, %s517
            %s524 = sand.u32 2147483647, %s522
            %s525 = smax.f32 %s523, %s524
            %p526 = scmp.eq.f32.partialorder %s525, 0.0
            %s527 = scalar_select %p526, 127.0, %s525
            %v528 = vstv %s527
            %v529 = vrcp.pop %v528
            %v530 = vmul.f32 %v528, %v529
            %v531 = vsub.f32 1.0, %v530
            %v532 = vmul.f32 %v529, %v531
            %v533 = vadd.f32 %v529, %v532
            %vm534 = vweird.f32 %v528
            %vm535 = vweird.f32 %v529
            %vm536 = vmor %vm534, %vm535
            %v537 = vsel %vm536, %v529, %v533
            %v538 = vand.u32 2147483647, %v528
            %vm539 = vcmp.eq.f32.partialorder %v538, 8.507059e+37
            %v540 = vand.u32 %v528, 2147483648
            %v541 = vor.u32 1.1754944e-38, %v540
            %v542 = vsel %vm539, %v541, %v537
            %v543 = vmul.f32 127.0, %v542
            %s544 = ssub.f32 0.0, %s525
            %s545 = scalar_lea.smem [#allocation4], 0
            %546 = sst [smem:[%s545]] %s544
            %s547 = scalar_lea.smem [#allocation4], 1
            %548 = sst [smem:[%s547]] %s525
            %s549 = vtos %v543
            %s550 = scalar_lea.smem [#allocation4], 2
            %551 = sst [smem:[%s550]] %s549
            %v552 = vrcp.pop %v543
            %v553 = vmul.f32 %v543, %v552
            %v554 = vsub.f32 1.0, %v553
            %v555 = vmul.f32 %v552, %v554
            %v556 = vadd.f32 %v552, %v555
            %vm557 = vweird.f32 %v543
            %vm558 = vweird.f32 %v552
            %vm559 = vmor %vm557, %vm558
            %v560 = vsel %vm559, %v552, %v556
            %v561 = vand.u32 2147483647, %v543
            %vm562 = vcmp.eq.f32.partialorder %v561, 8.507059e+37
            %v563 = vand.u32 %v543, 2147483648
            %v564 = vor.u32 1.1754944e-38, %v563
            %v565 = vsel %vm562, %v564, %v560
            %v566 = vmul.f32 1.0, %v565
            %s567 = vtos %v566
            %s568 = scalar_lea.smem [#allocation4], 3
            %569 = sst [smem:[%s568]] %s567
          $region44: #{fake_linear_quantization_forward.1} parent=35 // pred_fallthru
            _
        $region36: #{fake_linear_quantization_forward.1} parent=27 // pred_fallthru
          _
        %p570 = scmp.eq.s32.totalorder %s21, 1
        // Predicated region
        $region45: #{fake_linear_quantization_forward.1} parent=27 // pred_check
          %p571 = pneg %p570
        $region46: #{fake_linear_quantization_forward.1} parent=27 // pred_check_branch
          %573 = sbr.rel (%p571) target = $region48
        $region47: #{fake_linear_quantization_forward.1} parent=27 // pred_region
          %v574 = vld [vmem:[%s216] sm:$0xff]
          %v575 = vld [vmem:[%s216 + $0x8] sm:$0xff]
          %s576 = sld [smem:[#allocation4]]
          %s577 = sld [smem:[#allocation4 + $0x1]]
          %v578 = vstv %s576
          %v579 = vmax.f32 %v578, %v574
          %v580 = vmax.f32 %v578, %v575
          %v581 = vstv %s577
          %v582 = vmin.f32 %v581, %v579
          %v583 = vmin.f32 %v581, %v580
          %s584 = sld [smem:[#allocation4 + $0x2]]
          %v585 = vstv %s584
          %v586 = vmul.f32 %v585, %v582
          %v587 = vmul.f32 %v585, %v583
          %v588 = vround.ne.pseudo %v586
          %v589 = vround.ne.pseudo %v587
          %s590 = sld [smem:[#allocation4 + $0x3]]
          %v591 = vstv %s590
          %v592 = vmul.f32 %v588, %v591
          %v593 = vmul.f32 %v589, %v591
          %594 = vst [vmem:[%s222] sm:$0xff] %v592
          %595 = vst [vmem:[%s222 + $0x8] sm:$0xff] %v593
        $region48: #{fake_linear_quantization_forward.1} parent=27 // pred_fallthru
          _
        %s596 = smul.u32 %s22, %s21
        %p597 = scmp.lt.s32.totalorder %s596, 0
        %s598 = scalar_select %p597, %s596, 0
        %s599 = smul.addr %s598, 8
        %s600 = smul.addr %s599, 2
        %s601 = scalar_lea.vmem %s2, %s600
        // Predicated region
        $region49: #{fake_linear_quantization_forward.1} parent=27 // pred_check
          %p602 = pneg %p96
        $region50: #{fake_linear_quantization_forward.1} parent=27 // pred_check_branch
          %604 = sbr.rel (%p602) target = $region52
        $region51: #{fake_linear_quantization_forward.1} parent=27 // pred_region
          %s605 = smul.u32 %s22, %s21
        $region52: #{fake_linear_quantization_forward.1} parent=27 // pred_fallthru
          _
        // Predicated region
        $region53: #{fake_linear_quantization_forward.1} parent=27 // pred_check
          %p606 = pneg %p117
        $region54: #{fake_linear_quantization_forward.1} parent=27 // pred_check_branch
          %608 = sbr.rel (%p606) target = $region56
        $region55: #{fake_linear_quantization_forward.1} parent=27 // pred_region
          _
        $region56: #{fake_linear_quantization_forward.1} parent=27 // pred_fallthru
          _
        // Predicated region
        $region57: #{fake_linear_quantization_forward.1} parent=27 // pred_check
          %p609 = pneg %p138
        $region58: #{fake_linear_quantization_forward.1} parent=27 // pred_check_branch
          %611 = sbr.rel (%p609) target = $region60
        $region59: #{fake_linear_quantization_forward.1} parent=27 // pred_region
          _
        $region60: #{fake_linear_quantization_forward.1} parent=27 // pred_fallthru
          _
        // Predicated region
        $region61: #{fake_linear_quantization_forward.1} parent=27 // pred_check
          %p612 = pneg %p117
        $region62: #{fake_linear_quantization_forward.1} parent=27 // pred_check_branch
          %614 = sbr.rel (%p612) target = $region64
        $region63: #{fake_linear_quantization_forward.1} parent=27 // pred_region
          _
        $region64: #{fake_linear_quantization_forward.1} parent=27 // pred_fallthru
          _
        // Predicated region
        $region65: #{fake_linear_quantization_forward.1} parent=27 // pred_check
          %p615 = pneg %p138
        $region66: #{fake_linear_quantization_forward.1} parent=27 // pred_check_branch
          %617 = sbr.rel (%p615) target = $region68
        $region67: #{fake_linear_quantization_forward.1} parent=27 // pred_region
          _
        $region68: #{fake_linear_quantization_forward.1} parent=27 // pred_fallthru
          _
      $region28: #{fake_linear_quantization_forward.1} parent=5 // pred_fallthru
        _
      %p618 = scmp.le.s32.totalorder 2, %s12
      // Predicated region
      $region69: #{fake_linear_quantization_forward.1} parent=5 // pred_check
        %p619 = pneg %p618
      $region70: #{fake_linear_quantization_forward.1} parent=5 // pred_check_branch
        %621 = sbr.rel (%p619) target = $region72
      $region71: #{fake_linear_quantization_forward.1} parent=5 // pred_region
        %s622 = ssub.s32 %s12, 2
        // Predicated region
        $region73: #{fake_linear_quantization_forward.1} parent=71 // pred_check
          %p623 = pneg %p102
        $region74: #{fake_linear_quantization_forward.1} parent=71 // pred_check_branch
          %625 = sbr.rel (%p623) target = $region76
        $region75: #{fake_linear_quantization_forward.1} parent=71 // pred_region
          %s626 = smul.u32 %s24, %s23
          %p627 = scmp.lt.s32.totalorder %s626, 0
          %s628 = scalar_select %p627, %s626, 0
          %s629 = smul.addr %s628, 8
          %s630 = smul.addr %s629, 2
          %s631 = scalar_lea.vmem %s2, %s630
        $region76: #{fake_linear_quantization_forward.1} parent=71 // pred_fallthru
          _
      $region72: #{fake_linear_quantization_forward.1} parent=5 // pred_fallthru
        _
    $region6: #{fake_linear_quantization_forward.1} parent=1 // loop_footer
      %s16 = sadd.s32 1, %s12
    $region7: #{fake_linear_quantization_forward.1} parent=1 // loop_footer_branch
      %11 = sbr.rel target = $region3
    $region8: #{fake_linear_quantization_forward.1} parent=1 // loop_exit
      _
    %632 = vsyncpa [#allocation6], 1
    %s633 = scalar_lea.sflag [#allocation6], 1
    %634 = vsyncpa %s633, 1

</llo_original>
